<compile_context>
chip_gen: v7x
topology: tpu7x:2x2x1
jax: 0.10.0
libtpu: 0.0.40
codegen_flags: <defaults>
</compile_context>

<pallas_src>
import jax
import jax.numpy as jnp
from jax import lax
from jax.experimental import pallas as pl
from jax.experimental.pallas import tpu as pltpu  # noqa: F401  (TPU backend)

HIDDEN = 300       # fixed by the module (nn.Linear(inp, 300))
HIDDEN_PAD = 384   # 3 x 128 lanes; zero-padded, identical through ReLU


def _generator_kernel(xt_ref, w1_ref, b1_ref, w2_ref, b2_ref, out_ref):
    # xt_ref: [2, inp] f32   row 0 = times, row 1 = sizes
    # w1_ref: [inp, 2*H_PAD] bf16   = [w1_time | w1_size] (zero-padded cols)
    # b1_ref: [1, 2*H_PAD]   f32
    # w2_ref: [2*H_PAD, 2*out] bf16  block-diagonal (w_time / w_size)
    # b2_ref: [1, 2*out]     f32
    # out_ref:[1, 2*out]     f32   = [out_time | out_size]
    xt = xt_ref[...]                                     # [2, inp]

    # t -= t[0]  (shift only the time row; pure VPU, no data movement)
    t0 = xt[0:1, 0:1]                                    # [1, 1]
    row_id = lax.broadcasted_iota(jnp.int32, xt.shape, 0)
    xm = xt - jnp.where(row_id == 0, t0, 0.0)            # [2, inp]

    # Layer 1: one fused M=2 GEMM; row 0 sees w1_time, row 1 sees w1_size.
    w1 = w1_ref[...].astype(jnp.float32)
    y = jnp.dot(xm, w1, preferred_element_type=jnp.float32)   # [2, 2*H_PAD]
    y = jnp.maximum(y + b1_ref[...], 0.0)

    # Keep row 0 (time branch) for the first half of the columns,
    # row 1 (size branch) for the second half.
    two_h = y.shape[1]
    col_id = lax.broadcasted_iota(jnp.int32, (1, two_h), 1)
    h = jnp.where(col_id < (two_h // 2), y[0:1, :], y[1:2, :])  # [1, 2*H_PAD]

    # Layer 2: block-diagonal GEMM -> merged [1, 2*out] output.
    w2 = w2_ref[...].astype(jnp.float32)
    o = jnp.dot(h, w2, preferred_element_type=jnp.float32) + b2_ref[...]
    out_ref[...] = jnp.maximum(o, 0.0).astype(out_ref.dtype)


def init_generator_params(inp, out, key):
    """Logical parameters (same shapes as the PyTorch module).

    Weights stored as [in_features, out_features] (transposed vs torch's
    nn.Linear.weight) so the hot path is y = x @ W + b.
    """
    keys = jax.random.split(key, 8)
    scale1 = float(inp) ** -0.5
    scale2 = float(HIDDEN) ** -0.5
    return {
        "w1_time": jax.random.uniform(keys[0], (inp, HIDDEN), jnp.float32, -scale1, scale1),
        "b1_time": jax.random.uniform(keys[1], (1, HIDDEN), jnp.float32, -scale1, scale1),
        "w1_size": jax.random.uniform(keys[2], (inp, HIDDEN), jnp.float32, -scale1, scale1),
        "b1_size": jax.random.uniform(keys[3], (1, HIDDEN), jnp.float32, -scale1, scale1),
        "w_time":  jax.random.uniform(keys[4], (HIDDEN, out), jnp.float32, -scale2, scale2),
        "b_time":  jax.random.uniform(keys[5], (1, out), jnp.float32, -scale2, scale2),
        "w_size":  jax.random.uniform(keys[6], (HIDDEN, out), jnp.float32, -scale2, scale2),
        "b_size":  jax.random.uniform(keys[7], (1, out), jnp.float32, -scale2, scale2),
    }


def pack_generator_params(params, weight_dtype=jnp.bfloat16):
    """Pack the four Linear layers into fused/padded kernel operands (once)."""
    inp = params["w1_time"].shape[0]
    out = params["w_time"].shape[1]
    pad_h = HIDDEN_PAD - HIDDEN

    # Layer 1: side-by-side (time | size), hidden dim zero-padded to 384.
    w1t = jnp.pad(params["w1_time"], ((0, 0), (0, pad_h)))
    w1s = jnp.pad(params["w1_size"], ((0, 0), (0, pad_h)))
    w1 = jnp.concatenate([w1t, w1s], axis=1)                       # [inp, 2*HP]
    b1t = jnp.pad(params["b1_time"], ((0, 0), (0, pad_h)))
    b1s = jnp.pad(params["b1_size"], ((0, 0), (0, pad_h)))
    b1 = jnp.concatenate([b1t, b1s], axis=1)                       # [1, 2*HP]

    # Layer 2: block-diagonal so one GEMM does both branches.
    w2 = jnp.zeros((2 * HIDDEN_PAD, 2 * out), jnp.float32)
    w2 = w2.at[0:HIDDEN, 0:out].set(params["w_time"])
    w2 = w2.at[HIDDEN_PAD:HIDDEN_PAD + HIDDEN, out:2 * out].set(params["w_size"])
    b2 = jnp.concatenate([params["b_time"], params["b_size"]], axis=1)  # [1, 2*out]

    return {
        "w1": w1.astype(weight_dtype),
        "b1": b1.astype(jnp.float32),
        "w2": w2.astype(weight_dtype),
        "b2": b2.astype(jnp.float32),
    }


def generator_forward(x, packed):
    """x: [inp, 2] of (time, size) pairs. Returns (out_size, out_time), each [out]."""
    inp = x.shape[0]
    out = packed["b2"].shape[1] // 2

    xt = x.T.astype(jnp.float32)          # [2, inp]: row 0 = times, row 1 = sizes

    full = lambda shape: pl.BlockSpec(shape, lambda: (0,) * len(shape))

    o = pl.pallas_call(
        _generator_kernel,
        out_shape=jax.ShapeDtypeStruct((1, 2 * out), jnp.float32),
        grid=(),
        in_specs=[
            full((2, inp)),
            full(packed["w1"].shape), full(packed["b1"].shape),
            full(packed["w2"].shape), full(packed["b2"].shape),
        ],
        out_specs=full((1, 2 * out)),
    )(xt, packed["w1"], packed["b1"], packed["w2"], packed["b2"])

    out_time = o[0, :out]
    out_size = o[0, out:]
    return out_size, out_time   # PyTorch module returns (out_size, out_time)


def _reference_forward(x, params, weight_dtype=jnp.bfloat16):
    """Pure-JAX reference, using the same (bf16-rounded) weight values."""
    rd = lambda w: w.astype(weight_dtype).astype(jnp.float32)
    t = (x[:, 0] - x[0, 0]).astype(jnp.float32)
    s = x[:, 1].astype(jnp.float32)
    h_t = jnp.maximum(t @ rd(params["w1_time"]) + params["b1_time"][0], 0.0)
    h_s = jnp.maximum(s @ rd(params["w1_size"]) + params["b1_size"][0], 0.0)
    o_s = jnp.maximum(h_s @ rd(params["w_size"]) + params["b_size"][0], 0.0)
    o_t = jnp.maximum(h_t @ rd(params["w_time"]) + params["b_time"][0], 0.0)
    return o_s, o_t


if __name__ == "__main__":
    INP = 8    # sequence length of (time, size) pairs
    OUT = 8    # output feature size

    key = jax.random.PRNGKey(0)
    k_x, k_p = jax.random.split(key)

    # x: [INP, 2] -> column 0 = timestamps (monotone-ish), column 1 = sizes
    times = jnp.cumsum(jax.random.uniform(k_x, (INP,), jnp.float32, 0.0, 1.0)) + 100.0
    sizes = jax.random.uniform(jax.random.fold_in(k_x, 1), (INP,), jnp.float32, 40.0, 1500.0)
    x = jnp.stack([times, sizes], axis=1)

    params = init_generator_params(INP, OUT, k_p)
    packed = pack_generator_params(params, weight_dtype=jnp.bfloat16)

    out_size, out_time = generator_forward(x, packed)
    jax.block_until_ready((out_size, out_time))

    ref_size, ref_time = _reference_forward(x, params, weight_dtype=jnp.bfloat16)
    assert jnp.allclose(out_size, ref_size, rtol=1e-3, atol=1e-2), (out_size, ref_size)
    assert jnp.allclose(out_time, ref_time, rtol=1e-3, atol=1e-2), (out_time, ref_time)

    print("KERNEL_OK")
</pallas_src>

<mosaic_0001>
module attributes {stable_mosaic.version = 11 : i64} {
  func.func @_generator_kernel(%arg0: memref<2x8xf32, #tpu.memory_space<vmem>>, %arg1: memref<8x768xbf16, #tpu.memory_space<vmem>>, %arg2: memref<1x768xf32, #tpu.memory_space<vmem>>, %arg3: memref<768x16xbf16, #tpu.memory_space<vmem>>, %arg4: memref<1x16xf32, #tpu.memory_space<vmem>>, %arg5: memref<1x16xf32, #tpu.memory_space<vmem>>) attributes {dimension_semantics = [], scalar_prefetch = 0 : i64, scratch_operands = 0 : i64, tpu.core_type = #tpu.core_type<tc>} {
    %c0 = arith.constant 0 : index
    %c0_0 = arith.constant 0 : index
    %0 = vector.load %arg0[%c0, %c0_0] : memref<2x8xf32, #tpu.memory_space<vmem>>, vector<2x8xf32>
    %1 = vector.extract_strided_slice %0 {offsets = [0, 0], sizes = [1, 1], strides = [1, 1]} : vector<2x8xf32> to vector<1x1xf32>
    %2 = tpu.iota {dimensions = array<i32: 0>} : vector<2x8xi32>
    %c0_i32 = arith.constant 0 : i32
    %3 = vector.broadcast %c0_i32 : i32 to vector<2x8xi32>
    %4 = arith.cmpi eq, %2, %3 : vector<2x8xi32>
    %cst = arith.constant 0.000000e+00 : f32
    %5 = vector.shape_cast %1 : vector<1x1xf32> to vector<1x1xf32>
    %6 = vector.broadcast %5 : vector<1x1xf32> to vector<2x8xf32>
    %7 = vector.broadcast %cst : f32 to vector<2x8xf32>
    %8 = arith.select %4, %6, %7 : vector<2x8xi1>, vector<2x8xf32>
    %9 = arith.subf %0, %8 : vector<2x8xf32>
    %c0_1 = arith.constant 0 : index
    %c0_2 = arith.constant 0 : index
    %10 = vector.load %arg1[%c0_1, %c0_2] : memref<8x768xbf16, #tpu.memory_space<vmem>>, vector<8x768xbf16>
    %11 = arith.extf %10 : vector<8x768xbf16> to vector<8x768xf32>
    %cst_3 = arith.constant dense<0.000000e+00> : vector<2x768xf32>
    %12 = tpu.matmul %9, %11, %cst_3 {dimension_numbers = #tpu.dot_dimension_numbers<[1], [0], [0], [1], [0, 0, 1, 1], [], []>} : vector<2x8xf32>, vector<8x768xf32>, vector<2x768xf32> -> vector<2x768xf32>
    %c0_4 = arith.constant 0 : index
    %c0_5 = arith.constant 0 : index
    %13 = vector.load %arg2[%c0_4, %c0_5] : memref<1x768xf32, #tpu.memory_space<vmem>>, vector<1x768xf32>
    %14 = vector.broadcast %13 : vector<1x768xf32> to vector<2x768xf32>
    %15 = arith.addf %12, %14 : vector<2x768xf32>
    %cst_6 = arith.constant 0.000000e+00 : f32
    %16 = vector.broadcast %cst_6 : f32 to vector<2x768xf32>
    %17 = arith.maximumf %15, %16 : vector<2x768xf32>
    %18 = tpu.iota {dimensions = array<i32: 1>} : vector<1x768xi32>
    %c384_i32 = arith.constant 384 : i32
    %19 = vector.broadcast %c384_i32 : i32 to vector<1x768xi32>
    %20 = arith.cmpi slt, %18, %19 : vector<1x768xi32>
    %21 = vector.extract_strided_slice %17 {offsets = [0, 0], sizes = [1, 768], strides = [1, 1]} : vector<2x768xf32> to vector<1x768xf32>
    %22 = vector.extract_strided_slice %17 {offsets = [1, 0], sizes = [1, 768], strides = [1, 1]} : vector<2x768xf32> to vector<1x768xf32>
    %23 = arith.select %20, %21, %22 : vector<1x768xi1>, vector<1x768xf32>
    %c0_7 = arith.constant 0 : index
    %c0_8 = arith.constant 0 : index
    %24 = vector.load %arg3[%c0_7, %c0_8] : memref<768x16xbf16, #tpu.memory_space<vmem>>, vector<768x16xbf16>
    %25 = arith.extf %24 : vector<768x16xbf16> to vector<768x16xf32>
    %cst_9 = arith.constant dense<0.000000e+00> : vector<1x16xf32>
    %26 = tpu.matmul %23, %25, %cst_9 {dimension_numbers = #tpu.dot_dimension_numbers<[1], [0], [0], [1], [0, 0, 1, 1], [], []>} : vector<1x768xf32>, vector<768x16xf32>, vector<1x16xf32> -> vector<1x16xf32>
    %c0_10 = arith.constant 0 : index
    %c0_11 = arith.constant 0 : index
    %27 = vector.load %arg4[%c0_10, %c0_11] : memref<1x16xf32, #tpu.memory_space<vmem>>, vector<1x16xf32>
    %28 = arith.addf %26, %27 : vector<1x16xf32>
    %cst_12 = arith.constant 0.000000e+00 : f32
    %29 = vector.broadcast %cst_12 : f32 to vector<1x16xf32>
    %30 = arith.maximumf %28, %29 : vector<1x16xf32>
    %c0_13 = arith.constant 0 : index
    %c0_14 = arith.constant 0 : index
    %31 = vector.load %arg5[%c0_13, %c0_14] : memref<1x16xf32, #tpu.memory_space<vmem>>, vector<1x16xf32>
    tpu.vector_store %arg5[%c0_13, %c0_14], %30 {strides = array<i32>} : memref<1x16xf32, #tpu.memory_space<vmem>>, vector<1x16xf32>,
    return
  }
}

</mosaic_0001>

<llo_original>
// kernel: tpu_custom_call.1
$region0: #{tpu_custom_call.1}
  #allocation0 [shape = 'u32[]', space=smem, size = 0x4, offset = 0x4, fixed_abs, tag = 'smem constant byte address 0x4 - core index']
  #allocation1 [shape = 'u32[144,128]{1,0:T(1,128)}', space=vmem, size = 0x12000, scoped, tag = 'internal scratch']
  %s0 = inlined_call_operand.vmem [shape: f32[2,8], index: 0, kind: input, shape index: {}]
  %s1 = inlined_call_operand.vmem [shape: bf16[8,768], index: 1, kind: input, shape index: {}]
  %s2 = inlined_call_operand.vmem [shape: f32[1,768], index: 2, kind: input, shape index: {}]
  %s3 = inlined_call_operand.vmem [shape: bf16[768,16], index: 3, kind: input, shape index: {}]
  %s4 = inlined_call_operand.vmem [shape: f32[1,16], index: 4, kind: input, shape index: {}]
  %s5 = inlined_call_operand.hbm [shape: f32[1,16], index: 5, kind: output, shape index: {}]
  %s6 = sld [smem:[#allocation0]]
  $region30: #{tpu_custom_call.1} parent=0
    _
  %s8 = ssub.s32 1, %s6
  %s9 = scalar_select 0, %s8, %s6
  $region1: #{tpu_custom_call.1} parent=0
    #allocation2 [shape = 'u8[512]{0}', space=vmem, size = 0x400, scoped, tag = 'output window, operand 0, single buffered']
    #allocation3 [shape = 's32[1]{0}', space=sflag, size = 0x4, scoped, tag = 'scoped memory for tpu_custom_call.1']
    %10 = vsyncpa [#allocation3], 0
    // Predicated region
    $region2: #{tpu_custom_call.1} parent=1 // pred_check
      _
    $region3: #{tpu_custom_call.1} parent=1 // pred_check_branch
      %12 = sbr.rel (0) target = $region5
    $region4: #{tpu_custom_call.1} parent=1 // pred_region
      _
    $region5: #{tpu_custom_call.1} parent=1 // pred_fallthru
      _
    // Predicated region
    $region6: #{tpu_custom_call.1} parent=1 // pred_check
      _
    $region7: #{tpu_custom_call.1} parent=1 // pred_check_branch
      %14 = sbr.rel (0) target = $region9
    $region8: #{tpu_custom_call.1} parent=1 // pred_region
      _
    $region9: #{tpu_custom_call.1} parent=1 // pred_fallthru
      _
    // Predicated region
    $region10: #{tpu_custom_call.1} parent=1 // pred_check
      _
    $region11: #{tpu_custom_call.1} parent=1 // pred_check_branch
      %16 = sbr.rel (0) target = $region13
    $region12: #{tpu_custom_call.1} parent=1 // pred_region
      _
    $region13: #{tpu_custom_call.1} parent=1 // pred_fallthru
      _
    // Predicated region
    $region14: #{tpu_custom_call.1} parent=1 // pred_check
      _
    $region15: #{tpu_custom_call.1} parent=1 // pred_check_branch
      %18 = sbr.rel (0) target = $region17
    $region16: #{tpu_custom_call.1} parent=1 // pred_region
      _
    $region17: #{tpu_custom_call.1} parent=1 // pred_fallthru
      _
    // Predicated region
    $region18: #{tpu_custom_call.1} parent=1 // pred_check
      _
    $region19: #{tpu_custom_call.1} parent=1 // pred_check_branch
      %20 = sbr.rel (0) target = $region21
    $region20: #{tpu_custom_call.1} parent=1 // pred_region
      _
    $region21: #{tpu_custom_call.1} parent=1 // pred_fallthru
      _
    %v21 = vld [vmem:[%s0] sm:$0x3]
    %v22 = vlaneseq
    %v23 = vshrl.u32 %v22, 7
    %vm24 = vcmp.eq.s32.totalorder %v23, 0
    %s26 = vtos %v21
    %v27 = vstv %s26
    %v29 = vsel %vm24, %v27, 0.0
    %v30 = vsub.f32 %v21, %v29
    %v31 = vld [vmem:[%s1] sm:$0xff]
    %v32 = vld [vmem:[%s1 + $0x8] sm:$0xff]
    %v33 = vld [vmem:[%s1 + $0x10] sm:$0xff]
    %v34 = vunpack.c.l.bf16 %v31
    %v35 = vunpack.c.h.bf16 %v31
    %v36 = vunpack.c.l.bf16 %v32
    %v37 = vunpack.c.h.bf16 %v32
    %v38 = vunpack.c.l.bf16 %v33
    %v39 = vunpack.c.h.bf16 %v33
    %v40 = vld [vmem:[%s2] sm:$0x3f]
    %v42 = vlaneseq
    %v43 = vshrl.u32 %v42, 7
    %v44 = vsub.s32 0, %v43
    %v45 = vrot.slane %v40, %v44
    %v46 = vlaneseq
    %v47 = vshrl.u32 %v46, 7
    %v48 = vsub.s32 1, %v47
    %v49 = vrot.slane %v40, %v48
    %v50 = vlaneseq
    %v51 = vshrl.u32 %v50, 7
    %v52 = vsub.s32 2, %v51
    %v53 = vrot.slane %v40, %v52
    %v54 = vlaneseq
    %v55 = vshrl.u32 %v54, 7
    %v56 = vsub.s32 3, %v55
    %v57 = vrot.slane %v40, %v56
    %v58 = vlaneseq
    %v59 = vshrl.u32 %v58, 7
    %v60 = vsub.s32 4, %v59
    %v61 = vrot.slane %v40, %v60
    %v62 = vlaneseq
    %v63 = vshrl.u32 %v62, 7
    %v64 = vsub.s32 5, %v63
    %v65 = vrot.slane %v40, %v64
    %vm72 = vcmask 64512
    %v74 = vsel %vm72, %v30, 0
    %76 = vmatprep.subr.mxu0 %v35
    %77 = vmatpush1.msra.mxu0 %v34
    %78 = vmatprep.subr.mxu0 0.0
    %79 = vmatpush1.msra.mxu0 0.0
    %80 = vmatprep.subr.mxu0 0.0
    %81 = vmatpush1.msra.mxu0 0.0
    %82 = vmatprep.subr.mxu0 0.0
    %83 = vmatpush1.msra.mxu0 0.0
    %84 = vmatprep.subr.mxu0 0.0
    %85 = vmatpush1.msra.mxu0 0.0
    %86 = vmatprep.subr.mxu0 0.0
    %87 = vmatpush1.msra.mxu0 0.0
    %88 = vmatprep.subr.mxu0 0.0
    %89 = vmatpush1.msra.mxu0 0.0
    %90 = vmatprep.subr.mxu0 0.0
    %91 = vmatpush1.msra.mxu0 0.0
    %92 = vmatprep.subr.mxu0 0.0
    %93 = vmatpush1.msra.mxu0 0.0
    %94 = vmatprep.subr.mxu0 0.0
    %95 = vmatpush1.msra.mxu0 0.0
    %96 = vmatprep.subr.mxu0 0.0
    %97 = vmatpush1.msra.mxu0 0.0
    %98 = vmatprep.subr.mxu0 0.0
    %99 = vmatpush1.msra.mxu0 0.0
    %100 = vmatprep.subr.mxu0 0.0
    %101 = vmatpush1.msra.mxu0 0.0
    %102 = vmatprep.subr.mxu0 0.0
    %103 = vmatpush1.msra.mxu0 0.0
    %104 = vmatprep.subr.mxu0 0.0
    %105 = vmatpush1.msra.mxu0 0.0
    %106 = vmatprep.subr.mxu0 0.0
    %107 = vmatpush1.msra.mxu0 0.0
    %108 = vmatprep.subr.mxu0 0.0
    %109 = vmatpush1.msra.mxu0 0.0
    %110 = vmatprep.subr.mxu0 0.0
    %111 = vmatpush1.msra.mxu0 0.0
    %112 = vmatprep.subr.mxu0 0.0
    %113 = vmatpush1.msra.mxu0 0.0
    %114 = vmatprep.subr.mxu0 0.0
    %115 = vmatpush1.msra.mxu0 0.0
    %116 = vmatprep.subr.mxu0 0.0
    %117 = vmatpush1.msra.mxu0 0.0
    %118 = vmatprep.subr.mxu0 0.0
    %119 = vmatpush1.msra.mxu0 0.0
    %120 = vmatprep.subr.mxu0 0.0
    %121 = vmatpush1.msra.mxu0 0.0
    %122 = vmatprep.subr.mxu0 0.0
    %123 = vmatpush1.msra.mxu0 0.0
    %124 = vmatprep.subr.mxu0 0.0
    %125 = vmatpush1.msra.mxu0 0.0
    %126 = vmatprep.subr.mxu0 0.0
    %127 = vmatpush1.msra.mxu0 0.0
    %128 = vmatprep.subr.mxu0 0.0
    %129 = vmatpush1.msra.mxu0 0.0
    %130 = vmatprep.subr.mxu0 0.0
    %131 = vmatpush1.msra.mxu0 0.0
    %132 = vmatprep.subr.mxu0 0.0
    %133 = vmatpush1.msra.mxu0 0.0
    %134 = vmatprep.subr.mxu0 0.0
    %135 = vmatpush1.msra.mxu0 0.0
    %136 = vmatprep.subr.mxu0 0.0
    %137 = vmatpush1.msra.mxu0 0.0
    %138 = vmatprep.subr.mxu0 0.0
    %139 = vmatpush1.msra.mxu0 0.0
    %140 = vmatprep.mubr.f32.mxu0 0.0
    %141 = vmatmul.mubr.f32.gmra.mrb[0].mxu0 %v74
    %v142 = vpop.f32.mrb[0].mxu0
    %v143 = vadd.f32 %v45, %v142
    %v144 = vpop.f32.mrb[0].mxu0
    %v145 = vadd.f32 %v49, %v144
    %146 = vdwg.mxu0
    %147 = vmatprep.subr.mxu0 %v37
    %148 = vmatpush1.msra.mxu0 %v36
    %149 = vmatprep.subr.mxu0 0.0
    %150 = vmatpush1.msra.mxu0 0.0
    %151 = vmatprep.subr.mxu0 0.0
    %152 = vmatpush1.msra.mxu0 0.0
    %153 = vmatprep.subr.mxu0 0.0
    %154 = vmatpush1.msra.mxu0 0.0
    %155 = vmatprep.subr.mxu0 0.0
    %156 = vmatpush1.msra.mxu0 0.0
    %157 = vmatprep.subr.mxu0 0.0
    %158 = vmatpush1.msra.mxu0 0.0
    %159 = vmatprep.subr.mxu0 0.0
    %160 = vmatpush1.msra.mxu0 0.0
    %161 = vmatprep.subr.mxu0 0.0
    %162 = vmatpush1.msra.mxu0 0.0
    %163 = vmatprep.subr.mxu0 0.0
    %164 = vmatpush1.msra.mxu0 0.0
    %165 = vmatprep.subr.mxu0 0.0
    %166 = vmatpush1.msra.mxu0 0.0
    %167 = vmatprep.subr.mxu0 0.0
    %168 = vmatpush1.msra.mxu0 0.0
    %169 = vmatprep.subr.mxu0 0.0
    %170 = vmatpush1.msra.mxu0 0.0
    %171 = vmatprep.subr.mxu0 0.0
    %172 = vmatpush1.msra.mxu0 0.0
    %173 = vmatprep.subr.mxu0 0.0
    %174 = vmatpush1.msra.mxu0 0.0
    %175 = vmatprep.subr.mxu0 0.0
    %176 = vmatpush1.msra.mxu0 0.0
    %177 = vmatprep.subr.mxu0 0.0
    %178 = vmatpush1.msra.mxu0 0.0
    %179 = vmatprep.subr.mxu0 0.0
    %180 = vmatpush1.msra.mxu0 0.0
    %181 = vmatprep.subr.mxu0 0.0
    %182 = vmatpush1.msra.mxu0 0.0
    %183 = vmatprep.subr.mxu0 0.0
    %184 = vmatpush1.msra.mxu0 0.0
    %185 = vmatprep.subr.mxu0 0.0
    %186 = vmatpush1.msra.mxu0 0.0
    %187 = vmatprep.subr.mxu0 0.0
    %188 = vmatpush1.msra.mxu0 0.0
    %189 = vmatprep.subr.mxu0 0.0
    %190 = vmatpush1.msra.mxu0 0.0
    %191 = vmatprep.subr.mxu0 0.0
    %192 = vmatpush1.msra.mxu0 0.0
    %193 = vmatprep.subr.mxu0 0.0
    %194 = vmatpush1.msra.mxu0 0.0
    %195 = vmatprep.subr.mxu0 0.0
    %196 = vmatpush1.msra.mxu0 0.0
    %197 = vmatprep.subr.mxu0 0.0
    %198 = vmatpush1.msra.mxu0 0.0
    %199 = vmatprep.subr.mxu0 0.0
    %200 = vmatpush1.msra.mxu0 0.0
    %201 = vmatprep.subr.mxu0 0.0
    %202 = vmatpush1.msra.mxu0 0.0
    %203 = vmatprep.subr.mxu0 0.0
    %204 = vmatpush1.msra.mxu0 0.0
    %205 = vmatprep.subr.mxu0 0.0
    %206 = vmatpush1.msra.mxu0 0.0
    %207 = vmatprep.subr.mxu0 0.0
    %208 = vmatpush1.msra.mxu0 0.0
    %209 = vmatprep.subr.mxu0 0.0
    %210 = vmatpush1.msra.mxu0 0.0
    %211 = vmatprep.mubr.f32.mxu0 0.0
    %212 = vmatmul.mubr.f32.gmra.mrb[0].mxu0 %v74
    %v213 = vpop.f32.mrb[0].mxu0
    %v214 = vadd.f32 %v53, %v213
    %v215 = vpop.f32.mrb[0].mxu0
    %v216 = vadd.f32 %v57, %v215
    %217 = vdwg.mxu0
    %218 = vmatprep.subr.mxu0 %v39
    %219 = vmatpush1.msra.mxu0 %v38
    %220 = vmatprep.subr.mxu0 0.0
    %221 = vmatpush1.msra.mxu0 0.0
    %222 = vmatprep.subr.mxu0 0.0
    %223 = vmatpush1.msra.mxu0 0.0
    %224 = vmatprep.subr.mxu0 0.0
    %225 = vmatpush1.msra.mxu0 0.0
    %226 = vmatprep.subr.mxu0 0.0
    %227 = vmatpush1.msra.mxu0 0.0
    %228 = vmatprep.subr.mxu0 0.0
    %229 = vmatpush1.msra.mxu0 0.0
    %230 = vmatprep.subr.mxu0 0.0
    %231 = vmatpush1.msra.mxu0 0.0
    %232 = vmatprep.subr.mxu0 0.0
    %233 = vmatpush1.msra.mxu0 0.0
    %234 = vmatprep.subr.mxu0 0.0
    %235 = vmatpush1.msra.mxu0 0.0
    %236 = vmatprep.subr.mxu0 0.0
    %237 = vmatpush1.msra.mxu0 0.0
    %238 = vmatprep.subr.mxu0 0.0
    %239 = vmatpush1.msra.mxu0 0.0
    %240 = vmatprep.subr.mxu0 0.0
    %241 = vmatpush1.msra.mxu0 0.0
    %242 = vmatprep.subr.mxu0 0.0
    %243 = vmatpush1.msra.mxu0 0.0
    %244 = vmatprep.subr.mxu0 0.0
    %245 = vmatpush1.msra.mxu0 0.0
    %246 = vmatprep.subr.mxu0 0.0
    %247 = vmatpush1.msra.mxu0 0.0
    %248 = vmatprep.subr.mxu0 0.0
    %249 = vmatpush1.msra.mxu0 0.0
    %250 = vmatprep.subr.mxu0 0.0
    %251 = vmatpush1.msra.mxu0 0.0
    %252 = vmatprep.subr.mxu0 0.0
    %253 = vmatpush1.msra.mxu0 0.0
    %254 = vmatprep.subr.mxu0 0.0
    %255 = vmatpush1.msra.mxu0 0.0
    %256 = vmatprep.subr.mxu0 0.0
    %257 = vmatpush1.msra.mxu0 0.0
    %258 = vmatprep.subr.mxu0 0.0
    %259 = vmatpush1.msra.mxu0 0.0
    %260 = vmatprep.subr.mxu0 0.0
    %261 = vmatpush1.msra.mxu0 0.0
    %262 = vmatprep.subr.mxu0 0.0
    %263 = vmatpush1.msra.mxu0 0.0
    %264 = vmatprep.subr.mxu0 0.0
    %265 = vmatpush1.msra.mxu0 0.0
    %266 = vmatprep.subr.mxu0 0.0
    %267 = vmatpush1.msra.mxu0 0.0
    %268 = vmatprep.subr.mxu0 0.0
    %269 = vmatpush1.msra.mxu0 0.0
    %270 = vmatprep.subr.mxu0 0.0
    %271 = vmatpush1.msra.mxu0 0.0
    %272 = vmatprep.subr.mxu0 0.0
    %273 = vmatpush1.msra.mxu0 0.0
    %274 = vmatprep.subr.mxu0 0.0
    %275 = vmatpush1.msra.mxu0 0.0
    %276 = vmatprep.subr.mxu0 0.0
    %277 = vmatpush1.msra.mxu0 0.0
    %278 = vmatprep.subr.mxu0 0.0
    %279 = vmatpush1.msra.mxu0 0.0
    %280 = vmatprep.subr.mxu0 0.0
    %281 = vmatpush1.msra.mxu0 0.0
    %282 = vmatprep.mubr.f32.mxu0 0.0
    %283 = vmatmul.mubr.f32.gmra.mrb[0].mxu0 %v74
    %v284 = vpop.f32.mrb[0].mxu0
    %v285 = vadd.f32 %v61, %v284
    %v286 = vpop.f32.mrb[0].mxu0
    %v287 = vadd.f32 %v65, %v286
    %288 = vdwg.mxu0
    %v289 = vmax.f32 %v143, 0.0
    %v290 = vmax.f32 %v145, 0.0
    %v291 = vmax.f32 %v214, 0.0
    %v292 = vmax.f32 %v216, 0.0
    %v293 = vmax.f32 %v285, 0.0
    %v294 = vmax.f32 %v287, 0.0
    %v295 = vlaneseq
    %v296 = vand.u32 %v295, 127
    %v297 = vadd.s32 %v296, 128
    %v298 = vadd.s32 %v296, 256
    %v299 = vadd.s32 %v296, 384
    %v300 = vadd.s32 %v296, 512
    %v301 = vadd.s32 %v296, 640
    %vm302 = vcmp.lt.s32.totalorder %v296, 384
    %vm303 = vcmp.lt.s32.totalorder %v297, 384
    %vm304 = vcmp.lt.s32.totalorder %v298, 384
    %vm305 = vcmp.lt.s32.totalorder %v299, 384
    %vm306 = vcmp.lt.s32.totalorder %v300, 384
    %vm307 = vcmp.lt.s32.totalorder %v301, 384
    %v314 = vrot.slane %v289, 1
    %v315 = vrot.slane %v290, 1
    %v316 = vrot.slane %v291, 1
    %v317 = vrot.slane %v292, 1
    %v318 = vrot.slane %v293, 1
    %v319 = vrot.slane %v294, 1
    %v326 = vsel %vm302, %v289, %v314
    %v327 = vsel %vm303, %v290, %v315
    %v328 = vsel %vm304, %v291, %v316
    %v329 = vsel %vm305, %v292, %v317
    %v330 = vsel %vm306, %v293, %v318
    %v331 = vsel %vm307, %v294, %v319
    %v332 = vld [vmem:[%s3] sm:$0xf]
    %v333 = vld [vmem:[%s3 + $0x4] sm:$0xf]
    %v334 = vld [vmem:[%s3 + $0x8] sm:$0xf]
    %v335 = vld [vmem:[%s3 + $0xc] sm:$0xf]
    %v336 = vld [vmem:[%s3 + $0x10] sm:$0xf]
    %v337 = vld [vmem:[%s3 + $0x14] sm:$0xf]
    %v338 = vld [vmem:[%s3 + $0x18] sm:$0xf]
    %v339 = vld [vmem:[%s3 + $0x1c] sm:$0xf]
    %v340 = vld [vmem:[%s3 + $0x20] sm:$0xf]
    %v341 = vld [vmem:[%s3 + $0x24] sm:$0xf]
    %v342 = vld [vmem:[%s3 + $0x28] sm:$0xf]
    %v343 = vld [vmem:[%s3 + $0x2c] sm:$0xf]
    %v344 = vld [vmem:[%s3 + $0x30] sm:$0xf]
    %v345 = vld [vmem:[%s3 + $0x34] sm:$0xf]
    %v346 = vld [vmem:[%s3 + $0x38] sm:$0xf]
    %v347 = vld [vmem:[%s3 + $0x3c] sm:$0xf]
    %v348 = vld [vmem:[%s3 + $0x40] sm:$0xf]
    %v349 = vld [vmem:[%s3 + $0x44] sm:$0xf]
    %v350 = vld [vmem:[%s3 + $0x48] sm:$0xf]
    %v351 = vld [vmem:[%s3 + $0x4c] sm:$0xf]
    %v352 = vld [vmem:[%s3 + $0x50] sm:$0xf]
    %v353 = vld [vmem:[%s3 + $0x54] sm:$0xf]
    %v354 = vld [vmem:[%s3 + $0x58] sm:$0xf]
    %v355 = vld [vmem:[%s3 + $0x5c] sm:$0xf]
    %v356 = vld [vmem:[%s3 + $0x60] sm:$0xf]
    %v357 = vld [vmem:[%s3 + $0x64] sm:$0xf]
    %v358 = vld [vmem:[%s3 + $0x68] sm:$0xf]
    %v359 = vld [vmem:[%s3 + $0x6c] sm:$0xf]
    %v360 = vld [vmem:[%s3 + $0x70] sm:$0xf]
    %v361 = vld [vmem:[%s3 + $0x74] sm:$0xf]
    %v362 = vld [vmem:[%s3 + $0x78] sm:$0xf]
    %v363 = vld [vmem:[%s3 + $0x7c] sm:$0xf]
    %v364 = vld [vmem:[%s3 + $0x80] sm:$0xf]
    %v365 = vld [vmem:[%s3 + $0x84] sm:$0xf]
    %v366 = vld [vmem:[%s3 + $0x88] sm:$0xf]
    %v367 = vld [vmem:[%s3 + $0x8c] sm:$0xf]
    %v368 = vld [vmem:[%s3 + $0x90] sm:$0xf]
    %v369 = vld [vmem:[%s3 + $0x94] sm:$0xf]
    %v370 = vld [vmem:[%s3 + $0x98] sm:$0xf]
    %v371 = vld [vmem:[%s3 + $0x9c] sm:$0xf]
    %v372 = vld [vmem:[%s3 + $0xa0] sm:$0xf]
    %v373 = vld [vmem:[%s3 + $0xa4] sm:$0xf]
    %v374 = vld [vmem:[%s3 + $0xa8] sm:$0xf]
    %v375 = vld [vmem:[%s3 + $0xac] sm:$0xf]
    %v376 = vld [vmem:[%s3 + $0xb0] sm:$0xf]
    %v377 = vld [vmem:[%s3 + $0xb4] sm:$0xf]
    %v378 = vld [vmem:[%s3 + $0xb8] sm:$0xf]
    %v379 = vld [vmem:[%s3 + $0xbc] sm:$0xf]
    %v380 = vld [vmem:[%s3 + $0xc0] sm:$0xf]
    %v381 = vld [vmem:[%s3 + $0xc4] sm:$0xf]
    %v382 = vld [vmem:[%s3 + $0xc8] sm:$0xf]
    %v383 = vld [vmem:[%s3 + $0xcc] sm:$0xf]
    %v384 = vld [vmem:[%s3 + $0xd0] sm:$0xf]
    %v385 = vld [vmem:[%s3 + $0xd4] sm:$0xf]
    %v386 = vld [vmem:[%s3 + $0xd8] sm:$0xf]
    %v387 = vld [vmem:[%s3 + $0xdc] sm:$0xf]
    %v388 = vld [vmem:[%s3 + $0xe0] sm:$0xf]
    %v389 = vld [vmem:[%s3 + $0xe4] sm:$0xf]
    %v390 = vld [vmem:[%s3 + $0xe8] sm:$0xf]
    %v391 = vld [vmem:[%s3 + $0xec] sm:$0xf]
    %v392 = vld [vmem:[%s3 + $0xf0] sm:$0xf]
    %v393 = vld [vmem:[%s3 + $0xf4] sm:$0xf]
    %v394 = vld [vmem:[%s3 + $0xf8] sm:$0xf]
    %v395 = vld [vmem:[%s3 + $0xfc] sm:$0xf]
    %v396 = vld [vmem:[%s3 + $0x100] sm:$0xf]
    %v397 = vld [vmem:[%s3 + $0x104] sm:$0xf]
    %v398 = vld [vmem:[%s3 + $0x108] sm:$0xf]
    %v399 = vld [vmem:[%s3 + $0x10c] sm:$0xf]
    %v400 = vld [vmem:[%s3 + $0x110] sm:$0xf]
    %v401 = vld [vmem:[%s3 + $0x114] sm:$0xf]
    %v402 = vld [vmem:[%s3 + $0x118] sm:$0xf]
    %v403 = vld [vmem:[%s3 + $0x11c] sm:$0xf]
    %v404 = vld [vmem:[%s3 + $0x120] sm:$0xf]
    %v405 = vld [vmem:[%s3 + $0x124] sm:$0xf]
    %v406 = vld [vmem:[%s3 + $0x128] sm:$0xf]
    %v407 = vld [vmem:[%s3 + $0x12c] sm:$0xf]
    %v408 = vld [vmem:[%s3 + $0x130] sm:$0xf]
    %v409 = vld [vmem:[%s3 + $0x134] sm:$0xf]
    %v410 = vld [vmem:[%s3 + $0x138] sm:$0xf]
    %v411 = vld [vmem:[%s3 + $0x13c] sm:$0xf]
    %v412 = vld [vmem:[%s3 + $0x140] sm:$0xf]
    %v413 = vld [vmem:[%s3 + $0x144] sm:$0xf]
    %v414 = vld [vmem:[%s3 + $0x148] sm:$0xf]
    %v415 = vld [vmem:[%s3 + $0x14c] sm:$0xf]
    %v416 = vld [vmem:[%s3 + $0x150] sm:$0xf]
    %v417 = vld [vmem:[%s3 + $0x154] sm:$0xf]
    %v418 = vld [vmem:[%s3 + $0x158] sm:$0xf]
    %v419 = vld [vmem:[%s3 + $0x15c] sm:$0xf]
    %v420 = vld [vmem:[%s3 + $0x160] sm:$0xf]
    %v421 = vld [vmem:[%s3 + $0x164] sm:$0xf]
    %v422 = vld [vmem:[%s3 + $0x168] sm:$0xf]
    %v423 = vld [vmem:[%s3 + $0x16c] sm:$0xf]
    %v424 = vld [vmem:[%s3 + $0x170] sm:$0xf]
    %v425 = vld [vmem:[%s3 + $0x174] sm:$0xf]
    %v426 = vld [vmem:[%s3 + $0x178] sm:$0xf]
    %v427 = vld [vmem:[%s3 + $0x17c] sm:$0xf]
    %v428 = vunpack.c.l.bf16 %v332
    %v429 = vunpack.c.l.bf16 %v333
    %v430 = vunpack.c.l.bf16 %v334
    %v431 = vunpack.c.l.bf16 %v335
    %v432 = vunpack.c.l.bf16 %v336
    %v433 = vunpack.c.l.bf16 %v337
    %v434 = vunpack.c.l.bf16 %v338
    %v435 = vunpack.c.l.bf16 %v339
    %v436 = vunpack.c.l.bf16 %v340
    %v437 = vunpack.c.l.bf16 %v341
    %v438 = vunpack.c.l.bf16 %v342
    %v439 = vunpack.c.l.bf16 %v343
    %v440 = vunpack.c.l.bf16 %v344
    %v441 = vunpack.c.l.bf16 %v345
    %v442 = vunpack.c.l.bf16 %v346
    %v443 = vunpack.c.l.bf16 %v347
    %v444 = vunpack.c.l.bf16 %v348
    %v445 = vunpack.c.l.bf16 %v349
    %v446 = vunpack.c.l.bf16 %v350
    %v447 = vunpack.c.l.bf16 %v351
    %v448 = vunpack.c.l.bf16 %v352
    %v449 = vunpack.c.l.bf16 %v353
    %v450 = vunpack.c.l.bf16 %v354
    %v451 = vunpack.c.l.bf16 %v355
    %v452 = vunpack.c.l.bf16 %v356
    %v453 = vunpack.c.l.bf16 %v357
    %v454 = vunpack.c.l.bf16 %v358
    %v455 = vunpack.c.l.bf16 %v359
    %v456 = vunpack.c.l.bf16 %v360
    %v457 = vunpack.c.l.bf16 %v361
    %v458 = vunpack.c.l.bf16 %v362
    %v459 = vunpack.c.l.bf16 %v363
    %v460 = vunpack.c.l.bf16 %v364
    %v461 = vunpack.c.l.bf16 %v365
    %v462 = vunpack.c.l.bf16 %v366
    %v463 = vunpack.c.l.bf16 %v367
    %v464 = vunpack.c.l.bf16 %v368
    %v465 = vunpack.c.l.bf16 %v369
    %v466 = vunpack.c.l.bf16 %v370
    %v467 = vunpack.c.l.bf16 %v371
    %v468 = vunpack.c.l.bf16 %v372
    %v469 = vunpack.c.l.bf16 %v373
    %v470 = vunpack.c.l.bf16 %v374
    %v471 = vunpack.c.l.bf16 %v375
    %v472 = vunpack.c.l.bf16 %v376
    %v473 = vunpack.c.l.bf16 %v377
    %v474 = vunpack.c.l.bf16 %v378
    %v475 = vunpack.c.l.bf16 %v379
    %v476 = vunpack.c.l.bf16 %v380
    %v477 = vunpack.c.l.bf16 %v381
    %v478 = vunpack.c.l.bf16 %v382
    %v479 = vunpack.c.l.bf16 %v383
    %v480 = vunpack.c.l.bf16 %v384
    %v481 = vunpack.c.l.bf16 %v385
    %v482 = vunpack.c.l.bf16 %v386
    %v483 = vunpack.c.l.bf16 %v387
    %v484 = vunpack.c.l.bf16 %v388
    %v485 = vunpack.c.l.bf16 %v389
    %v486 = vunpack.c.l.bf16 %v390
    %v487 = vunpack.c.l.bf16 %v391
    %v488 = vunpack.c.l.bf16 %v392
    %v489 = vunpack.c.l.bf16 %v393
    %v490 = vunpack.c.l.bf16 %v394
    %v491 = vunpack.c.l.bf16 %v395
    %v492 = vunpack.c.l.bf16 %v396
    %v493 = vunpack.c.l.bf16 %v397
    %v494 = vunpack.c.l.bf16 %v398
    %v495 = vunpack.c.l.bf16 %v399
    %v496 = vunpack.c.l.bf16 %v400
    %v497 = vunpack.c.l.bf16 %v401
    %v498 = vunpack.c.l.bf16 %v402
    %v499 = vunpack.c.l.bf16 %v403
    %v500 = vunpack.c.l.bf16 %v404
    %v501 = vunpack.c.l.bf16 %v405
    %v502 = vunpack.c.l.bf16 %v406
    %v503 = vunpack.c.l.bf16 %v407
    %v504 = vunpack.c.l.bf16 %v408
    %v505 = vunpack.c.l.bf16 %v409
    %v506 = vunpack.c.l.bf16 %v410
    %v507 = vunpack.c.l.bf16 %v411
    %v508 = vunpack.c.l.bf16 %v412
    %v509 = vunpack.c.l.bf16 %v413
    %v510 = vunpack.c.l.bf16 %v414
    %v511 = vunpack.c.l.bf16 %v415
    %v512 = vunpack.c.l.bf16 %v416
    %v513 = vunpack.c.l.bf16 %v417
    %v514 = vunpack.c.l.bf16 %v418
    %v515 = vunpack.c.l.bf16 %v419
    %v516 = vunpack.c.l.bf16 %v420
    %v517 = vunpack.c.l.bf16 %v421
    %v518 = vunpack.c.l.bf16 %v422
    %v519 = vunpack.c.l.bf16 %v423
    %v520 = vunpack.c.l.bf16 %v424
    %v521 = vunpack.c.l.bf16 %v425
    %v522 = vunpack.c.l.bf16 %v426
    %v523 = vunpack.c.l.bf16 %v427
    %v524 = vld [vmem:[%s4] sm:$0x1]
    %525 = vmatprep.subr.mxu0 0.0
    %526 = vmatpush1.msra.mxu0 %v428
    %527 = vmatprep.subr.mxu0 0.0
    %528 = vmatpush1.msra.mxu0 %v429
    %529 = vmatprep.subr.mxu0 0.0
    %530 = vmatpush1.msra.mxu0 %v430
    %531 = vmatprep.subr.mxu0 0.0
    %532 = vmatpush1.msra.mxu0 %v431
    %533 = vmatprep.subr.mxu0 0.0
    %534 = vmatpush1.msra.mxu0 %v432
    %535 = vmatprep.subr.mxu0 0.0
    %536 = vmatpush1.msra.mxu0 %v433
    %537 = vmatprep.subr.mxu0 0.0
    %538 = vmatpush1.msra.mxu0 %v434
    %539 = vmatprep.subr.mxu0 0.0
    %540 = vmatpush1.msra.mxu0 %v435
    %541 = vmatprep.subr.mxu0 0.0
    %542 = vmatpush1.msra.mxu0 %v436
    %543 = vmatprep.subr.mxu0 0.0
    %544 = vmatpush1.msra.mxu0 %v437
    %545 = vmatprep.subr.mxu0 0.0
    %546 = vmatpush1.msra.mxu0 %v438
    %547 = vmatprep.subr.mxu0 0.0
    %548 = vmatpush1.msra.mxu0 %v439
    %549 = vmatprep.subr.mxu0 0.0
    %550 = vmatpush1.msra.mxu0 %v440
    %551 = vmatprep.subr.mxu0 0.0
    %552 = vmatpush1.msra.mxu0 %v441
    %553 = vmatprep.subr.mxu0 0.0
    %554 = vmatpush1.msra.mxu0 %v442
    %555 = vmatprep.subr.mxu0 0.0
    %556 = vmatpush1.msra.mxu0 %v443
    %557 = vmatprep.subr.mxu0 0.0
    %558 = vmatpush1.msra.mxu0 %v444
    %559 = vmatprep.subr.mxu0 0.0
    %560 = vmatpush1.msra.mxu0 %v445
    %561 = vmatprep.subr.mxu0 0.0
    %562 = vmatpush1.msra.mxu0 %v446
    %563 = vmatprep.subr.mxu0 0.0
    %564 = vmatpush1.msra.mxu0 %v447
    %565 = vmatprep.subr.mxu0 0.0
    %566 = vmatpush1.msra.mxu0 %v448
    %567 = vmatprep.subr.mxu0 0.0
    %568 = vmatpush1.msra.mxu0 %v449
    %569 = vmatprep.subr.mxu0 0.0
    %570 = vmatpush1.msra.mxu0 %v450
    %571 = vmatprep.subr.mxu0 0.0
    %572 = vmatpush1.msra.mxu0 %v451
    %573 = vmatprep.subr.mxu0 0.0
    %574 = vmatpush1.msra.mxu0 %v452
    %575 = vmatprep.subr.mxu0 0.0
    %576 = vmatpush1.msra.mxu0 %v453
    %577 = vmatprep.subr.mxu0 0.0
    %578 = vmatpush1.msra.mxu0 %v454
    %579 = vmatprep.subr.mxu0 0.0
    %580 = vmatpush1.msra.mxu0 %v455
    %581 = vmatprep.subr.mxu0 0.0
    %582 = vmatpush1.msra.mxu0 %v456
    %583 = vmatprep.subr.mxu0 0.0
    %584 = vmatpush1.msra.mxu0 %v457
    %585 = vmatprep.subr.mxu0 0.0
    %586 = vmatpush1.msra.mxu0 %v458
    %587 = vmatprep.subr.mxu0 0.0
    %588 = vmatpush1.msra.mxu0 %v459
    %589 = vmatprep.mubr.f32.mxu0 %v327
    %590 = vmatmul.mubr.f32.gmra.mrb[0].mxu0 %v326
    %v591 = vpop.f32.mrb[0].mxu0
    %v592 = vadd.f32 %v524, %v591
    %v593 = vpop.f32.mrb[0].mxu0
    %594 = vdwg.mxu0
    %595 = vmatprep.subr.mxu0 0.0
    %596 = vmatpush1.msra.mxu0 %v460
    %597 = vmatprep.subr.mxu0 0.0
    %598 = vmatpush1.msra.mxu0 %v461
    %599 = vmatprep.subr.mxu0 0.0
    %600 = vmatpush1.msra.mxu0 %v462
    %601 = vmatprep.subr.mxu0 0.0
    %602 = vmatpush1.msra.mxu0 %v463
    %603 = vmatprep.subr.mxu0 0.0
    %604 = vmatpush1.msra.mxu0 %v464
    %605 = vmatprep.subr.mxu0 0.0
    %606 = vmatpush1.msra.mxu0 %v465
    %607 = vmatprep.subr.mxu0 0.0
    %608 = vmatpush1.msra.mxu0 %v466
    %609 = vmatprep.subr.mxu0 0.0
    %610 = vmatpush1.msra.mxu0 %v467
    %611 = vmatprep.subr.mxu0 0.0
    %612 = vmatpush1.msra.mxu0 %v468
    %613 = vmatprep.subr.mxu0 0.0
    %614 = vmatpush1.msra.mxu0 %v469
    %615 = vmatprep.subr.mxu0 0.0
    %616 = vmatpush1.msra.mxu0 %v470
    %617 = vmatprep.subr.mxu0 0.0
    %618 = vmatpush1.msra.mxu0 %v471
    %619 = vmatprep.subr.mxu0 0.0
    %620 = vmatpush1.msra.mxu0 %v472
    %621 = vmatprep.subr.mxu0 0.0
    %622 = vmatpush1.msra.mxu0 %v473
    %623 = vmatprep.subr.mxu0 0.0
    %624 = vmatpush1.msra.mxu0 %v474
    %625 = vmatprep.subr.mxu0 0.0
    %626 = vmatpush1.msra.mxu0 %v475
    %627 = vmatprep.subr.mxu0 0.0
    %628 = vmatpush1.msra.mxu0 %v476
    %629 = vmatprep.subr.mxu0 0.0
    %630 = vmatpush1.msra.mxu0 %v477
    %631 = vmatprep.subr.mxu0 0.0
    %632 = vmatpush1.msra.mxu0 %v478
    %633 = vmatprep.subr.mxu0 0.0
    %634 = vmatpush1.msra.mxu0 %v479
    %635 = vmatprep.subr.mxu0 0.0
    %636 = vmatpush1.msra.mxu0 %v480
    %637 = vmatprep.subr.mxu0 0.0
    %638 = vmatpush1.msra.mxu0 %v481
    %639 = vmatprep.subr.mxu0 0.0
    %640 = vmatpush1.msra.mxu0 %v482
    %641 = vmatprep.subr.mxu0 0.0
    %642 = vmatpush1.msra.mxu0 %v483
    %643 = vmatprep.subr.mxu0 0.0
    %644 = vmatpush1.msra.mxu0 %v484
    %645 = vmatprep.subr.mxu0 0.0
    %646 = vmatpush1.msra.mxu0 %v485
    %647 = vmatprep.subr.mxu0 0.0
    %648 = vmatpush1.msra.mxu0 %v486
    %649 = vmatprep.subr.mxu0 0.0
    %650 = vmatpush1.msra.mxu0 %v487
    %651 = vmatprep.subr.mxu0 0.0
    %652 = vmatpush1.msra.mxu0 %v488
    %653 = vmatprep.subr.mxu0 0.0
    %654 = vmatpush1.msra.mxu0 %v489
    %655 = vmatprep.subr.mxu0 0.0
    %656 = vmatpush1.msra.mxu0 %v490
    %657 = vmatprep.subr.mxu0 0.0
    %658 = vmatpush1.msra.mxu0 %v491
    %659 = vmatprep.mubr.f32.mxu0 %v329
    %660 = vmatmul.mubr.f32.gmra.mrb[0].mxu0 %v328
    %v661 = vpop.f32.mrb[0].mxu0
    %v662 = vadd.f32 %v592, %v661
    %v663 = vpop.f32.mrb[0].mxu0
    %664 = vdwg.mxu0
    %665 = vmatprep.subr.mxu0 0.0
    %666 = vmatpush1.msra.mxu0 %v492
    %667 = vmatprep.subr.mxu0 0.0
    %668 = vmatpush1.msra.mxu0 %v493
    %669 = vmatprep.subr.mxu0 0.0
    %670 = vmatpush1.msra.mxu0 %v494
    %671 = vmatprep.subr.mxu0 0.0
    %672 = vmatpush1.msra.mxu0 %v495
    %673 = vmatprep.subr.mxu0 0.0
    %674 = vmatpush1.msra.mxu0 %v496
    %675 = vmatprep.subr.mxu0 0.0
    %676 = vmatpush1.msra.mxu0 %v497
    %677 = vmatprep.subr.mxu0 0.0
    %678 = vmatpush1.msra.mxu0 %v498
    %679 = vmatprep.subr.mxu0 0.0
    %680 = vmatpush1.msra.mxu0 %v499
    %681 = vmatprep.subr.mxu0 0.0
    %682 = vmatpush1.msra.mxu0 %v500
    %683 = vmatprep.subr.mxu0 0.0
    %684 = vmatpush1.msra.mxu0 %v501
    %685 = vmatprep.subr.mxu0 0.0
    %686 = vmatpush1.msra.mxu0 %v502
    %687 = vmatprep.subr.mxu0 0.0
    %688 = vmatpush1.msra.mxu0 %v503
    %689 = vmatprep.subr.mxu0 0.0
    %690 = vmatpush1.msra.mxu0 %v504
    %691 = vmatprep.subr.mxu0 0.0
    %692 = vmatpush1.msra.mxu0 %v505
    %693 = vmatprep.subr.mxu0 0.0
    %694 = vmatpush1.msra.mxu0 %v506
    %695 = vmatprep.subr.mxu0 0.0
    %696 = vmatpush1.msra.mxu0 %v507
    %697 = vmatprep.subr.mxu0 0.0
    %698 = vmatpush1.msra.mxu0 %v508
    %699 = vmatprep.subr.mxu0 0.0
    %700 = vmatpush1.msra.mxu0 %v509
    %701 = vmatprep.subr.mxu0 0.0
    %702 = vmatpush1.msra.mxu0 %v510
    %703 = vmatprep.subr.mxu0 0.0
    %704 = vmatpush1.msra.mxu0 %v511
    %705 = vmatprep.subr.mxu0 0.0
    %706 = vmatpush1.msra.mxu0 %v512
    %707 = vmatprep.subr.mxu0 0.0
    %708 = vmatpush1.msra.mxu0 %v513
    %709 = vmatprep.subr.mxu0 0.0
    %710 = vmatpush1.msra.mxu0 %v514
    %711 = vmatprep.subr.mxu0 0.0
    %712 = vmatpush1.msra.mxu0 %v515
    %713 = vmatprep.subr.mxu0 0.0
    %714 = vmatpush1.msra.mxu0 %v516
    %715 = vmatprep.subr.mxu0 0.0
    %716 = vmatpush1.msra.mxu0 %v517
    %717 = vmatprep.subr.mxu0 0.0
    %718 = vmatpush1.msra.mxu0 %v518
    %719 = vmatprep.subr.mxu0 0.0
    %720 = vmatpush1.msra.mxu0 %v519
    %721 = vmatprep.subr.mxu0 0.0
    %722 = vmatpush1.msra.mxu0 %v520
    %723 = vmatprep.subr.mxu0 0.0
    %724 = vmatpush1.msra.mxu0 %v521
    %725 = vmatprep.subr.mxu0 0.0
    %726 = vmatpush1.msra.mxu0 %v522
    %727 = vmatprep.subr.mxu0 0.0
    %728 = vmatpush1.msra.mxu0 %v523
    %729 = vmatprep.mubr.f32.mxu0 %v331
    %730 = vmatmul.mubr.f32.gmra.mrb[0].mxu0 %v330
    %v731 = vpop.f32.mrb[0].mxu0
    %v732 = vadd.f32 %v662, %v731
    %v733 = vpop.f32.mrb[0].mxu0
    %734 = vdwg.mxu0
    %v735 = vmax.f32 %v732, 0.0
    %vm736 = vcmask 122880
    %737 = vst.msk [vmem:[#allocation2] sm:$0x1] %vm736, %v735
    // Predicated region
    $region22: #{tpu_custom_call.1} parent=1 // pred_check
      _
    $region23: #{tpu_custom_call.1} parent=1 // pred_check_branch
      %739 = sbr.rel (0) target = $region25
    $region24: #{tpu_custom_call.1} parent=1 // pred_region
      %s741 = ssub.s32 16, 16
      %742 = vsyncadd [#allocation3], %s741
      %s744 = sshll.u32 [#allocation2], 4
      %s745 = int_to_ptr.vmem [resolvable:$true] %s744
      %747 = dma.vmem_to_hbm [thread:$0]  %s745, 16, %s5, [#allocation3]
    $region25: #{tpu_custom_call.1} parent=1 // pred_fallthru
      _
    // Predicated region
    $region26: #{tpu_custom_call.1} parent=1 // pred_check
      _
    $region27: #{tpu_custom_call.1} parent=1 // pred_check_branch
      %749 = sbr.rel (0) target = $region29
    $region28: #{tpu_custom_call.1} parent=1 // pred_region
      %750 = dma.done [#allocation3], 16
    $region29: #{tpu_custom_call.1} parent=1 // pred_fallthru
      _
    %751 = vsyncpa [#allocation3], 1

</llo_original>
